<compile_context>
chip_gen: v6e
topology: v6e:2x2x1
jax: 0.10.0
libtpu: 0.0.40
codegen_flags: <defaults>
</compile_context>

<pallas_src>
from functools import partial

import jax
import jax.numpy as jnp
from jax.experimental import pallas as pl
from jax.experimental.pallas import tpu as pltpu


def _sigm_kernel(x_ref, o_ref, *, inv_len):
    # x_ref block: (TR, L); gate is per-row, L is full-extent inside the block.
    x = x_ref[...]
    # f32 accumulation for the mean (accuracy); native-dtype multiply (speed).
    s = jnp.sum(x.astype(jnp.float32), axis=-1, keepdims=True)       # (TR, 1)
    y = jnp.clip(s * inv_len + 3.0, 0.0, 6.0) * (1.0 / 6.0)           # h_sigmoid
    o_ref[...] = (x * y.astype(x.dtype)).astype(o_ref.dtype)


def _sigm_jax3d(x):
    """Fused-XLA fallback / reference core on a (b, c, L) tensor."""
    y = jnp.mean(x, axis=-1, keepdims=True)
    y = jnp.clip(y + 3.0, 0.0, 6.0) * (1.0 / 6.0)
    return x * y


def sigm_forward(x, output_channel, *, use_pallas=None,
                 target_block_bytes=2 * 1024 * 1024,
                 min_pallas_bytes=1 * 1024 * 1024):
    """JAX/Pallas equivalent of SigM.forward (in_channel == output_channel)."""
    x_sz = x.ndim
    if x_sz == 2:
        x = x[..., None]
    b, c, L = x.shape
    assert c == output_channel, (
        "only the in_channel == output_channel path is implemented")

    itemsize = x.dtype.itemsize
    R = b * c
    row_bytes = L * itemsize
    total_bytes = R * row_bytes

    # Sublane packing granularity: 8 rows for 4-byte, 16 for 2-byte, 32 for 1-byte.
    sub = max(8, 8 * (4 // max(itemsize, 1)))

    # Largest row tile (multiple of `sub`) whose block stays <= target bytes.
    rows_fit = max(1, target_block_bytes // max(row_bytes, 1))
    tr = max(sub, (rows_fit // sub) * sub)
    if R <= tr:
        tr = R  # full-extent sublane block is always legal

    block_bytes = tr * row_bytes
    # in + out, double-buffered -> ~4x block resident; keep under ~40 MiB (v7x).
    fits_vmem = (4 * block_bytes) <= (40 * 1024 * 1024)

    if use_pallas is None:
        use_pallas = (total_bytes >= min_pallas_bytes) and fits_vmem
    if use_pallas and not fits_vmem:
        # Escape hatch for enormous L (see TODO above): let XLA handle it.
        use_pallas = False

    if not use_pallas:
        out = _sigm_jax3d(x)
    else:
        x2 = x.reshape(R, L)  # contiguous reshape: metadata only, no HBM pass
        out2 = pl.pallas_call(
            partial(_sigm_kernel, inv_len=1.0 / L),
            out_shape=jax.ShapeDtypeStruct((R, L), x.dtype),
            grid_spec=pl.GridSpec(
                grid=(pl.cdiv(R, tr),),
                in_specs=[pl.BlockSpec((tr, L), lambda i: (i, 0))],
                out_specs=pl.BlockSpec((tr, L), lambda i: (i, 0)),
            ),
            compiler_params=pltpu.CompilerParams(
                dimension_semantics=("parallel",),
                vmem_limit_bytes=48 * 1024 * 1024,
            ),
            cost_estimate=pl.CostEstimate(
                flops=3 * R * L,
                transcendentals=0,
                bytes_accessed=2 * R * L * itemsize,
            ),
        )(x2)
        out = out2.reshape(b, c, L)

    if x_sz == 2:
        out = out[..., 0]
    return out


def sigm_reference(x, output_channel):
    """Pure-JAX reference mirroring the PyTorch module (for checking)."""
    x_sz = x.ndim
    if x_sz == 2:
        x = x[..., None]
    out = _sigm_jax3d(x)
    if x_sz == 2:
        out = out[..., 0]
    return out


if __name__ == "__main__":
    key = jax.random.PRNGKey(0)
    k1, k2, k3, k4 = jax.random.split(key, 4)

    # 1) Pallas path, f32: (batch=2, channels=8, seq=128), lane-dense L.
    x_f32 = jax.random.normal(k1, (2, 8, 128), dtype=jnp.float32)
    out = sigm_forward(x_f32, output_channel=8, use_pallas=True)
    jax.block_until_ready(out)
    ref = sigm_reference(x_f32, output_channel=8)
    assert out.shape == x_f32.shape
    assert jnp.allclose(out, ref, atol=1e-5, rtol=1e-5)

    # 2) Pallas path, bf16: native-dtype multiply, f32-accumulated mean.
    x_bf16 = jax.random.normal(k2, (2, 16, 256), dtype=jnp.float32).astype(jnp.bfloat16)
    out_bf = sigm_forward(x_bf16, output_channel=16, use_pallas=True)
    jax.block_until_ready(out_bf)
    ref_bf = sigm_reference(x_bf16.astype(jnp.float32), output_channel=16)
    assert out_bf.shape == x_bf16.shape
    assert jnp.allclose(out_bf.astype(jnp.float32), ref_bf, atol=5e-2, rtol=5e-2)

    # 3) Tiny 3-D input (module-sized demo) -> auto-dispatch to fused XLA path.
    x_small = jax.random.normal(k3, (2, 4, 16), dtype=jnp.float32)
    out_s = sigm_forward(x_small, output_channel=4)
    jax.block_until_ready(out_s)
    assert out_s.shape == (2, 4, 16)
    assert jnp.allclose(out_s, sigm_reference(x_small, 4), atol=1e-5, rtol=1e-5)

    # 4) 2-D input path (unsqueeze(-1) / squeeze(-1)).
    x2d = jax.random.normal(k4, (2, 4), dtype=jnp.float32)
    out2d = sigm_forward(x2d, output_channel=4)
    jax.block_until_ready(out2d)
    assert out2d.shape == (2, 4)
    assert jnp.allclose(out2d, sigm_reference(x2d, 4), atol=1e-5, rtol=1e-5)

    print("KERNEL_OK")
</pallas_src>

<mosaic_0001>
module attributes {stable_mosaic.version = 11 : i64} {
  func.func @_sigm_kernel(%arg0: i32, %arg1: memref<16x128xf32, #tpu.memory_space<vmem>>, %arg2: memref<16x128xf32, #tpu.memory_space<vmem>>) attributes {dimension_semantics = [#tpu.dimension_semantics<parallel>], iteration_bounds = array<i64: 1>, scalar_prefetch = 0 : i64, scratch_operands = 0 : i64, tpu.core_type = #tpu.core_type<tc>, window_params = [{transform_indices = @transform_0, window_bounds = array<i64: 16, 128>}, {transform_indices = @transform_1, window_bounds = array<i64: 16, 128>}]} {
    %c0 = arith.constant 0 : index
    %c0_0 = arith.constant 0 : index
    %0 = vector.load %arg1[%c0, %c0_0] : memref<16x128xf32, #tpu.memory_space<vmem>>, vector<16x128xf32>
    %cst = arith.constant dense<0.000000e+00> : vector<16xf32>
    %1 = vector.multi_reduction <add>, %0, %cst [1] : vector<16x128xf32> to vector<16xf32>
    %2 = vector.shape_cast %1 : vector<16xf32> to vector<16x1xf32>
    %cst_1 = arith.constant 7.812500e-03 : f32
    %3 = vector.broadcast %cst_1 : f32 to vector<16x1xf32>
    %4 = arith.mulf %2, %3 : vector<16x1xf32>
    %cst_2 = arith.constant 3.000000e+00 : f32
    %5 = vector.broadcast %cst_2 : f32 to vector<16x1xf32>
    %6 = arith.addf %4, %5 : vector<16x1xf32>
    %cst_3 = arith.constant 0.000000e+00 : f32
    %cst_4 = arith.constant 6.000000e+00 : f32
    %7 = vector.broadcast %cst_3 : f32 to vector<16x1xf32>
    %8 = arith.maximumf %7, %6 : vector<16x1xf32>
    %9 = vector.broadcast %cst_4 : f32 to vector<16x1xf32>
    %10 = arith.minimumf %9, %8 : vector<16x1xf32>
    %cst_5 = arith.constant 0.166666672 : f32
    %11 = vector.broadcast %cst_5 : f32 to vector<16x1xf32>
    %12 = arith.mulf %10, %11 : vector<16x1xf32>
    %13 = vector.broadcast %12 : vector<16x1xf32> to vector<16x128xf32>
    %14 = arith.mulf %0, %13 : vector<16x128xf32>
    %c0_6 = arith.constant 0 : index
    %c0_7 = arith.constant 0 : index
    %15 = vector.load %arg2[%c0_6, %c0_7] : memref<16x128xf32, #tpu.memory_space<vmem>>, vector<16x128xf32>
    tpu.vector_store %arg2[%c0_6, %c0_7], %14 {strides = array<i32>} : memref<16x128xf32, #tpu.memory_space<vmem>>, vector<16x128xf32>,
    return
  }
  func.func @transform_0(%arg0: i32) -> (i32, i32) {
    %c0_i32 = arith.constant 0 : i32
    %c0_i32_0 = arith.constant 0 : i32
    return %arg0, %c0_i32 : i32, i32
  }
  func.func @transform_1(%arg0: i32) -> (i32, i32) {
    %c0_i32 = arith.constant 0 : i32
    %c0_i32_0 = arith.constant 0 : i32
    return %arg0, %c0_i32 : i32, i32
  }
}

</mosaic_0001>

<llo_original>
// kernel: tpu_custom_call.1
$region0: #{tpu_custom_call.1}
  #allocation0 [shape = 'u32[]', space=smem, size = 0x4, offset = 0x4, fixed_abs, tag = 'smem constant byte address 0x4 - core index']
  #allocation1 [shape = 'u32[144,128]{1,0:T(1,128)}', space=vmem, size = 0x12000, scoped, tag = 'internal scratch']
  %s0 = inlined_call_operand.hbm [shape: f32[16,128], index: 0, kind: input, shape index: {}]
  %s1 = inlined_call_operand.hbm [shape: f32[16,128], index: 1, kind: output, shape index: {}]
  %s2 = sld [smem:[#allocation0]]
  $region18: #{tpu_custom_call.1} parent=0
    _
  %s4 = ssub.s32 1, %s2
  %s5 = scalar_select 0, %s4, %s2
  $region1: #{tpu_custom_call.1} parent=0
    #allocation2 [shape = 'u8[8192]{0}', space=vmem, size = 0x2000, scoped, tag = 'input window, operand 0, single buffered']
    #allocation3 [shape = 's32[1]{0}', space=sflag, size = 0x4, scoped, tag = 'scoped memory for tpu_custom_call.1']
    #allocation4 [shape = 's32[1]{0}', space=sflag, size = 0x4, scoped, tag = 'scoped memory for tpu_custom_call.1']
    #allocation5 [shape = 'u8[8192]{0}', space=vmem, size = 0x2000, scoped, tag = 'output window, operand 0, single buffered']
    %6 = vsyncpa [#allocation3], 0
    %7 = vsyncpa [#allocation4], 0
    // Predicated region
    $region2: #{tpu_custom_call.1} parent=1 // pred_check
      _
    $region3: #{tpu_custom_call.1} parent=1 // pred_check_branch
      %9 = sbr.rel (0) target = $region5
    $region4: #{tpu_custom_call.1} parent=1 // pred_region
      %s11 = ssub.s32 256, 256
      %12 = vsyncadd [#allocation3], %s11
      %s13 = sshll.u32 [#allocation2], 4
      %s14 = int_to_ptr.vmem [resolvable:$true] %s13
      %19 = dma.hbm_to_vmem [thread:$0]  %s0, 256, %s14, [#allocation3], 128, 128, 8
    $region5: #{tpu_custom_call.1} parent=1 // pred_fallthru
      _
    // Predicated region
    $region6: #{tpu_custom_call.1} parent=1 // pred_check
      _
    $region7: #{tpu_custom_call.1} parent=1 // pred_check_branch
      %21 = sbr.rel (0) target = $region9
    $region8: #{tpu_custom_call.1} parent=1 // pred_region
      %22 = dma.done [#allocation3], 256
    $region9: #{tpu_custom_call.1} parent=1 // pred_fallthru
      _
    %v23 = vld [vmem:[#allocation2] sm:$0xff]
    %v24 = vld [vmem:[#allocation2 + $0x8] sm:$0xff]
    %25 = vadd.xlane.f32.xlu0 %v23
    %v26 = vpop.xlane.xlu0 %25
    %27 = vadd.xlane.f32.xlu0 %v24
    %v28 = vpop.xlane.xlu0 %27
    %v29 = vmul.f32 %v26, 0.0078125
    %v30 = vmul.f32 %v28, 0.0078125
    %v31 = vadd.f32 %v29, 3.0
    %v32 = vadd.f32 %v30, 3.0
    %v33 = vmax.f32 %v31, 0.0
    %v34 = vmax.f32 %v32, 0.0
    %v35 = vmin.f32 %v33, 6.0
    %v36 = vmin.f32 %v34, 6.0
    %v37 = vmul.f32 %v35, 0.16666667
    %v38 = vmul.f32 %v36, 0.16666667
    %v39 = vmul.f32 %v23, %v37
    %v40 = vmul.f32 %v24, %v38
    %41 = vst [vmem:[#allocation5] sm:$0xff] %v39
    %42 = vst [vmem:[#allocation5 + $0x8] sm:$0xff] %v40
    // Predicated region
    $region10: #{tpu_custom_call.1} parent=1 // pred_check
      _
    $region11: #{tpu_custom_call.1} parent=1 // pred_check_branch
      %44 = sbr.rel (0) target = $region13
    $region12: #{tpu_custom_call.1} parent=1 // pred_region
      %s46 = ssub.s32 256, 256
      %47 = vsyncadd [#allocation4], %s46
      %s48 = sshll.u32 [#allocation5], 4
      %s49 = int_to_ptr.vmem [resolvable:$true] %s48
      %54 = dma.vmem_to_hbm [thread:$0]  %s49, 256, %s1, [#allocation4], 128, 128, 8
    $region13: #{tpu_custom_call.1} parent=1 // pred_fallthru
      _
    // Predicated region
    $region14: #{tpu_custom_call.1} parent=1 // pred_check
      _
    $region15: #{tpu_custom_call.1} parent=1 // pred_check_branch
      %56 = sbr.rel (0) target = $region17
    $region16: #{tpu_custom_call.1} parent=1 // pred_region
      %57 = dma.done [#allocation4], 256
    $region17: #{tpu_custom_call.1} parent=1 // pred_fallthru
      _
    %58 = vsyncpa [#allocation3], 1
    %59 = vsyncpa [#allocation4], 1

</llo_original>
